<compile_context>
chip_gen: v6e
topology: v6e:2x2x1
jax: 0.10.0
libtpu: 0.0.40
codegen_flags: <defaults>
</compile_context>

<pallas_src>
import jax
import jax.numpy as jnp
from jax.experimental import pallas as pl
from jax.experimental.pallas import tpu as pltpu


def _pos_embed_kernel(w_ref, out_ref, sems):
    # w_ref  : (ts, d_model) VMEM   -- current seq-chunk of W_pos (auto-pipelined)
    # out_ref: (batch, seq, d_model) raw HBM (memory_space=pl.ANY)
    # sems   : (kwin,) DMA semaphores -- in-flight DMA window
    batch = out_ref.shape[0]
    ts = w_ref.shape[0]
    kwin = sems.shape[0]
    nwin = min(kwin, batch)                # static Python int
    row0 = pl.program_id(0) * ts           # element offset of this chunk along seq

    def row_copy(b, slot):
        # One DMA: the VMEM W chunk -> rows [row0, row0+ts) of batch row b in HBM.
        return pltpu.make_async_copy(
            w_ref, out_ref.at[b, pl.ds(row0, ts), :], sems.at[slot])

    # Prologue: fill the DMA window (static, <= 8 iterations).
    for b in range(nwin):
        row_copy(b, b).start()

    # Steady state: retire the oldest DMA, issue the next (rolled loop).
    if batch > nwin:
        @pl.loop(nwin, batch)
        def _(b):
            slot = b % nwin
            row_copy(b - nwin, slot).wait()
            row_copy(b, slot).start()

    # Drain: wait for the last nwin rows (static, <= 8 iterations) so the
    # pipeline may safely recycle the W input buffer after this grid step.
    for i in range(nwin):
        b = batch - nwin + i
        row_copy(b, b % nwin).wait()


def _choose_chunk_rows(seq, d_model, itemsize, target_bytes):
    """Largest seq-chunk (rows) with chunk_bytes <= target; full seq if it fits."""
    row_bytes = d_model * itemsize
    if seq * row_bytes <= target_bytes:
        return seq                          # single full-extent chunk (no alignment needed)
    sublane = max(8, 32 // itemsize)        # 8 rows f32, 16 bf16, 32 for 1-byte dtypes
    max_rows = max(sublane, (target_bytes // row_bytes) // sublane * sublane)
    t = (min(max_rows, seq) // sublane) * sublane
    while t >= sublane:                     # largest sublane-aligned divisor of seq
        if seq % t == 0:
            return t
        t -= sublane
    return seq                              # no aligned divisor: fall back to one chunk


def pos_embed(tokens: jax.Array, W_pos: jax.Array,
              *, chunk_target_bytes: int = 8 << 20, max_dma_window: int = 8) -> jax.Array:
    """tokens: [batch, seq] (ints, values unused); W_pos: [n_ctx, d_model]."""
    batch, seq = tokens.shape
    n_ctx, d_model = W_pos.shape
    assert seq <= n_ctx, "sequence length exceeds n_ctx"
    dtype = W_pos.dtype
    itemsize = jnp.dtype(dtype).itemsize

    w = W_pos[:seq]                         # exact rows: no seq padding, no post-slice
    ts = _choose_chunk_rows(seq, d_model, itemsize, chunk_target_bytes)
    n_chunks = seq // ts                    # ts divides seq, or ts == seq (1 chunk)

    kwin = max(1, min(max_dma_window, batch))
    chunk_bytes = ts * d_model * itemsize
    out_bytes = batch * seq * d_model * itemsize
    # Only the W chunk lives in VMEM (double-buffered by the input pipeline);
    # the output goes straight to HBM, so the VMEM budget stays tiny.
    vmem_limit = min(max(2 * chunk_bytes + (2 << 20), 8 << 20), 100 << 20)

    return pl.pallas_call(
        _pos_embed_kernel,
        out_shape=jax.ShapeDtypeStruct((batch, seq, d_model), dtype),
        grid_spec=pltpu.PrefetchScalarGridSpec(
            num_scalar_prefetch=0,
            grid=(n_chunks,),
            in_specs=[pl.BlockSpec((ts, d_model), lambda j: (j, 0))],
            out_specs=pl.BlockSpec(memory_space=pl.ANY),
            scratch_shapes=[pltpu.SemaphoreType.DMA((kwin,))],
        ),
        compiler_params=pltpu.CompilerParams(
            dimension_semantics=("parallel",),
            vmem_limit_bytes=vmem_limit,
        ),
        cost_estimate=pl.CostEstimate(
            flops=0, transcendentals=0,
            bytes_accessed=out_bytes + seq * d_model * itemsize),
    )(w)


if __name__ == "__main__":
    key = jax.random.PRNGKey(0)
    k_w, k_tok = jax.random.split(key)
    init_range = 0.02

    # Case 1: tile-aligned f32 config (small stand-in for d_model=768, n_ctx=1024).
    batch, seq, n_ctx, d_model = 2, 8, 64, 128
    W_pos = (init_range * jax.random.normal(k_w, (n_ctx, d_model))).astype(jnp.float32)
    tokens = jax.random.randint(k_tok, (batch, seq), 0, 50257, dtype=jnp.int32)
    out = jax.block_until_ready(pos_embed(tokens, W_pos))
    ref = jnp.broadcast_to(W_pos[:seq][None, :, :], (batch, seq, d_model))
    assert out.shape == (batch, seq, d_model)
    assert out.dtype == W_pos.dtype
    assert jnp.array_equal(out, ref)

    # Case 2: ragged seq + bf16 (exercises the full-extent, unpadded block path).
    batch2, seq2 = 4, 12
    W_pos_bf16 = W_pos.astype(jnp.bfloat16)
    tokens2 = jax.random.randint(k_tok, (batch2, seq2), 0, 50257, dtype=jnp.int32)
    out2 = jax.block_until_ready(pos_embed(tokens2, W_pos_bf16))
    ref2 = jnp.broadcast_to(W_pos_bf16[:seq2][None, :, :], (batch2, seq2, d_model))
    assert out2.shape == (batch2, seq2, d_model)
    assert out2.dtype == jnp.bfloat16
    assert jnp.array_equal(out2, ref2)

    # Case 3: force seq-chunking (grid > 1) and a batch larger than the DMA
    # window, exercising the prologue / steady pl.loop / drain paths.
    batch3, seq3 = 16, 32
    tokens3 = jax.random.randint(k_tok, (batch3, seq3), 0, 50257, dtype=jnp.int32)
    out3 = jax.block_until_ready(
        pos_embed(tokens3, W_pos, chunk_target_bytes=8 * d_model * 4))
    ref3 = jnp.broadcast_to(W_pos[:seq3][None, :, :], (batch3, seq3, d_model))
    assert out3.shape == (batch3, seq3, d_model)
    assert jnp.array_equal(out3, ref3)

    print("KERNEL_OK")
</pallas_src>

<mosaic_0001>
module attributes {stable_mosaic.version = 11 : i64} {
  func.func @_pos_embed_kernel(%arg0: i32, %arg1: memref<8x128xf32, #tpu.memory_space<vmem>>, %arg2: memref<2x8x128xf32, #tpu.memory_space<any>>, %arg3: memref<2x!tpu.dma_semaphore, #tpu.memory_space<semaphore_mem>>) attributes {dimension_semantics = [#tpu.dimension_semantics<parallel>], iteration_bounds = array<i64: 1>, scalar_prefetch = 0 : i64, scratch_operands = 1 : i64, tpu.core_type = #tpu.core_type<tc>, window_params = [{transform_indices = @transform_0, window_bounds = array<i64: 8, 128>}, {}]} {
    %c8_i32 = arith.constant 8 : i32
    %0 = arith.muli %arg0, %c8_i32 : i32
    %c0_i32 = arith.constant 0 : i32
    %c0_i32_0 = arith.constant 0 : i32
    %c0_i32_1 = arith.constant 0 : i32
    %1 = tpu.memref_slice %arg2[%c0_i32, %0, %c0_i32_1] : memref<2x8x128xf32, #tpu.memory_space<any>> -> memref<1x8x128xf32, #tpu.memory_space<any>>
    %2 = tpu.memref_squeeze %1 : memref<1x8x128xf32, #tpu.memory_space<any>> -> memref<8x128xf32, #tpu.memory_space<any>>
    %3 = tpu.memref_slice %arg3[%c0_i32_0] : memref<2x!tpu.dma_semaphore, #tpu.memory_space<semaphore_mem>> -> memref<1x!tpu.dma_semaphore, #tpu.memory_space<semaphore_mem>>
    %4 = tpu.memref_squeeze %3 : memref<1x!tpu.dma_semaphore, #tpu.memory_space<semaphore_mem>> -> memref<!tpu.dma_semaphore, #tpu.memory_space<semaphore_mem>>
    tpu.enqueue_dma source(%arg1 : memref<8x128xf32, #tpu.memory_space<vmem>>) target(%2 : memref<8x128xf32, #tpu.memory_space<any>>) target_semaphore(%4 : memref<!tpu.dma_semaphore, #tpu.memory_space<semaphore_mem>>)
    %c1_i32 = arith.constant 1 : i32
    %c1_i32_2 = arith.constant 1 : i32
    %c0_i32_3 = arith.constant 0 : i32
    %5 = tpu.memref_slice %arg2[%c1_i32, %0, %c0_i32_3] : memref<2x8x128xf32, #tpu.memory_space<any>> -> memref<1x8x128xf32, #tpu.memory_space<any>>
    %6 = tpu.memref_squeeze %5 : memref<1x8x128xf32, #tpu.memory_space<any>> -> memref<8x128xf32, #tpu.memory_space<any>>
    %7 = tpu.memref_slice %arg3[%c1_i32_2] : memref<2x!tpu.dma_semaphore, #tpu.memory_space<semaphore_mem>> -> memref<1x!tpu.dma_semaphore, #tpu.memory_space<semaphore_mem>>
    %8 = tpu.memref_squeeze %7 : memref<1x!tpu.dma_semaphore, #tpu.memory_space<semaphore_mem>> -> memref<!tpu.dma_semaphore, #tpu.memory_space<semaphore_mem>>
    tpu.enqueue_dma source(%arg1 : memref<8x128xf32, #tpu.memory_space<vmem>>) target(%6 : memref<8x128xf32, #tpu.memory_space<any>>) target_semaphore(%8 : memref<!tpu.dma_semaphore, #tpu.memory_space<semaphore_mem>>)
    %c0_i32_4 = arith.constant 0 : i32
    %c0_i32_5 = arith.constant 0 : i32
    %c0_i32_6 = arith.constant 0 : i32
    %9 = tpu.memref_slice %arg2[%c0_i32_4, %0, %c0_i32_6] : memref<2x8x128xf32, #tpu.memory_space<any>> -> memref<1x8x128xf32, #tpu.memory_space<any>>
    %10 = tpu.memref_squeeze %9 : memref<1x8x128xf32, #tpu.memory_space<any>> -> memref<8x128xf32, #tpu.memory_space<any>>
    %11 = tpu.memref_slice %arg3[%c0_i32_5] : memref<2x!tpu.dma_semaphore, #tpu.memory_space<semaphore_mem>> -> memref<1x!tpu.dma_semaphore, #tpu.memory_space<semaphore_mem>>
    %12 = tpu.memref_squeeze %11 : memref<1x!tpu.dma_semaphore, #tpu.memory_space<semaphore_mem>> -> memref<!tpu.dma_semaphore, #tpu.memory_space<semaphore_mem>>
    tpu.wait_dma2 semaphore(%12 : memref<!tpu.dma_semaphore, #tpu.memory_space<semaphore_mem>>) src(%arg1 : memref<8x128xf32, #tpu.memory_space<vmem>>) dst(%10 : memref<8x128xf32, #tpu.memory_space<any>>)
    %c1_i32_7 = arith.constant 1 : i32
    %c1_i32_8 = arith.constant 1 : i32
    %c0_i32_9 = arith.constant 0 : i32
    %13 = tpu.memref_slice %arg2[%c1_i32_7, %0, %c0_i32_9] : memref<2x8x128xf32, #tpu.memory_space<any>> -> memref<1x8x128xf32, #tpu.memory_space<any>>
    %14 = tpu.memref_squeeze %13 : memref<1x8x128xf32, #tpu.memory_space<any>> -> memref<8x128xf32, #tpu.memory_space<any>>
    %15 = tpu.memref_slice %arg3[%c1_i32_8] : memref<2x!tpu.dma_semaphore, #tpu.memory_space<semaphore_mem>> -> memref<1x!tpu.dma_semaphore, #tpu.memory_space<semaphore_mem>>
    %16 = tpu.memref_squeeze %15 : memref<1x!tpu.dma_semaphore, #tpu.memory_space<semaphore_mem>> -> memref<!tpu.dma_semaphore, #tpu.memory_space<semaphore_mem>>
    tpu.wait_dma2 semaphore(%16 : memref<!tpu.dma_semaphore, #tpu.memory_space<semaphore_mem>>) src(%arg1 : memref<8x128xf32, #tpu.memory_space<vmem>>) dst(%14 : memref<8x128xf32, #tpu.memory_space<any>>)
    return
  }
  func.func @transform_0(%arg0: i32) -> (i32, i32) {
    %c0_i32 = arith.constant 0 : i32
    %c0_i32_0 = arith.constant 0 : i32
    return %arg0, %c0_i32 : i32, i32
  }
}

</mosaic_0001>

<llo_original>
// kernel: tpu_custom_call.1
$region0: #{tpu_custom_call.1}
  #allocation0 [shape = 'u32[]', space=smem, size = 0x4, offset = 0x4, fixed_abs, tag = 'smem constant byte address 0x4 - core index']
  #allocation1 [shape = 'u32[144,128]{1,0:T(1,128)}', space=vmem, size = 0x12000, scoped, tag = 'internal scratch']
  #allocation2 [shape = 's32[2]{0}', space=sflag, size = 0x8, scoped, tag = 'scratch operand']
  #allocation5 [shape = 's32[]', space=sflag, size = 0x4, offset = 0, fixed_abs, tag = 'sflag constant byte address 0x0 - dummy sync flag']
  #allocation6 [shape = 's32[]', space=sflag, size = 0x4, offset = 0, fixed_abs, tag = 'sflag constant byte address 0x0 - dummy sync flag']
  #allocation7 [shape = 'u32[]', space=smem, size = 0x4, offset = 0x44, fixed_abs, tag = 'smem constant byte address 0x44 - assertion arg 0']
  #allocation8 [shape = 'u32[]', space=smem, size = 0x4, offset = 0x48, fixed_abs, tag = 'smem constant byte address 0x48 - assertion arg 1']
  #allocation9 [shape = 's32[]', space=sflag, size = 0x4, offset = 0, fixed_abs, tag = 'sflag constant byte address 0x0 - dummy sync flag']
  #allocation10 [shape = 's32[]', space=sflag, size = 0x4, offset = 0, fixed_abs, tag = 'sflag constant byte address 0x0 - dummy sync flag']
  %s0 = inlined_call_operand.hbm [shape: f32[8,128], index: 0, kind: input, shape index: {}]
  %s1 = inlined_call_operand.hbm [shape: f32[2,8,128], index: 1, kind: output, shape index: {}]
  %s2 = sld [smem:[#allocation0]]
  $region18: #{tpu_custom_call.1} parent=0
    _
  %s4 = ssub.s32 1, %s2
  %s5 = scalar_select 0, %s4, %s2
  $region1: #{tpu_custom_call.1} parent=0
    #allocation3 [shape = 'u8[4096]{0}', space=vmem, size = 0x1000, scoped, tag = 'input window, operand 0, single buffered']
    #allocation4 [shape = 's32[1]{0}', space=sflag, size = 0x4, scoped, tag = 'scoped memory for tpu_custom_call.1']
    %6 = vsyncpa [#allocation4], 0
    // Predicated region
    $region2: #{tpu_custom_call.1} parent=1 // pred_check
      _
    $region3: #{tpu_custom_call.1} parent=1 // pred_check_branch
      %8 = sbr.rel (0) target = $region5
    $region4: #{tpu_custom_call.1} parent=1 // pred_region
      %s10 = ssub.s32 128, 128
      %11 = vsyncadd [#allocation4], %s10
      %s13 = sshll.u32 [#allocation3], 4
      %s14 = int_to_ptr.vmem [resolvable:$true] %s13
      %16 = dma.hbm_to_vmem [thread:$0]  %s0, 128, %s14, [#allocation4]
    $region5: #{tpu_custom_call.1} parent=1 // pred_fallthru
      _
    // Predicated region
    $region6: #{tpu_custom_call.1} parent=1 // pred_check
      _
    $region7: #{tpu_custom_call.1} parent=1 // pred_check_branch
      %18 = sbr.rel (0) target = $region9
    $region8: #{tpu_custom_call.1} parent=1 // pred_region
      %19 = dma.done [#allocation4], 128
    $region9: #{tpu_custom_call.1} parent=1 // pred_fallthru
      _
    %s20 = smul.u32 0, 8
    %s21 = smul.addr %s20, 16
    %s22 = scalar_lea.hbm %s1, %s21
    // Predicated region
    $region10: #{tpu_custom_call.1} parent=1 // pred_check
      _
    $region11: #{tpu_custom_call.1} parent=1 // pred_check_branch
      %24 = sbr.rel target = $region13
    $region12: #{tpu_custom_call.1} parent=1 // pred_region
      %25 = sst [smem:[#allocation7]] [#allocation6]
      %26 = sst [smem:[#allocation8]] [#allocation5]
    $region13: #{tpu_custom_call.1} parent=1 // pred_fallthru
      _
    %28 = shalt.err (0)
    %s30 = sshll.u32 [#allocation3], 4
    %s31 = int_to_ptr.vmem [resolvable:$true] %s30
    %33 = dma.vmem_to_hbm [thread:$0]  %s31, 128, %s22, [#allocation2]
    %s34 = sadd.s32 %s20, 8
    %s35 = smul.addr %s34, 16
    %s36 = scalar_lea.hbm %s1, %s35
    %s37 = scalar_lea.sflag [#allocation2], 1
    // Predicated region
    $region14: #{tpu_custom_call.1} parent=1 // pred_check
      _
    $region15: #{tpu_custom_call.1} parent=1 // pred_check_branch
      %39 = sbr.rel target = $region17
    $region16: #{tpu_custom_call.1} parent=1 // pred_region
      %40 = sst [smem:[#allocation7]] [#allocation10]
      %41 = sst [smem:[#allocation8]] [#allocation9]
    $region17: #{tpu_custom_call.1} parent=1 // pred_fallthru
      _
    %43 = shalt.err (0)
    %s45 = sshll.u32 [#allocation3], 4
    %s46 = int_to_ptr.vmem [resolvable:$true] %s45
    %48 = dma.vmem_to_hbm [thread:$0]  %s46, 128, %s36, %s37
    %s49 = smul.u32 8, 1
    %s50 = sshll.u32 %s49, 4
    %51 = dma.done [#allocation2], %s50
    %s52 = sshll.u32 %s49, 4
    %53 = dma.done %s37, %s52
    %54 = vsyncpa [#allocation4], 1
  %55 = vsyncmov [#allocation2]
  %s56 = vpop.sfrf %55
  %p57 = scmp.eq.s32.totalorder %s56, 0
  %p58 = pneg %p57
  %60 = shalt.err (%p58)
  %s61 = scalar_lea.sflag [#allocation2], 1
  %62 = vsyncmov %s61
  %s63 = vpop.sfrf %62
  %p64 = scmp.eq.s32.totalorder %s63, 0
  %p65 = pneg %p64
  %67 = shalt.err (%p65)

</llo_original>
